<compile_context>
chip_gen: v5e
topology: v5e:2x2
jax: 0.10.0
libtpu: 0.0.40
codegen_flags: <defaults>
</compile_context>

<pallas_src>
import jax
import jax.numpy as jnp
from jax.experimental import pallas as pl
from jax.experimental.pallas import tpu as pltpu  # noqa: F401  (TPU memory spaces / params)

_LANE = 128
_SUBLANE = 8


def _round_up(v, m):
    return -(-v // m) * m


def _pad2(a, rows, cols):
    return jnp.pad(a, ((0, rows - a.shape[0]), (0, cols - a.shape[1])))


# ------------------------------ Pallas kernel -------------------------------

def _make_fused_gcn_kernel(num_hidden):
    """Fused: conv1 -> num_hidden hidden convs -> mean readout -> predict."""

    def kernel(adj_ref, x_ref, w1_ref, b1_ref, wh_ref, bh_ref,
               wp_ref, bp_ref, mean_ref, o_ref):
        adj = adj_ref[...]                                        # bf16 (Np, Np)

        def conv(h_bf16, w_bf16, b_f32):
            # message passing: sum over in-neighbors = A @ H  (f32 accumulation on MXU)
            agg = jnp.dot(adj, h_bf16, preferred_element_type=jnp.float32)
            # Linear + ReLU
            z = jnp.dot(agg.astype(jnp.bfloat16), w_bf16,
                        preferred_element_type=jnp.float32) + b_f32
            return jnp.maximum(z, 0.0)

        # conv1
        h = conv(x_ref[...], w1_ref[...], b1_ref[...])            # f32 (Np, Hp)
        # hidden conv layers (static unroll); H stays resident on-chip between layers
        for i in range(num_hidden):
            h = conv(h.astype(jnp.bfloat16), wh_ref[i], bh_ref[i])

        # mean readout as a lane-dense matmul (rides the MXU, not the XLU):
        # mean_ref holds 1/N for real nodes, 0 for padded rows.
        gmean = jnp.dot(mean_ref[...], h,
                        preferred_element_type=jnp.float32)       # (1, Hp) f32
        o_ref[...] = jnp.dot(gmean, wp_ref[...],
                             preferred_element_type=jnp.float32) + bp_ref[...]

    return kernel


# ------------------------------- JAX wrapper ---------------------------------

def custom_gcn_forward(adj, x, conv1_w_t, conv1_b, hidden_w_t, hidden_b,
                       predict_w_t, predict_b):
    """
    adj:         (N, N) f32, adj[dst, src] = 1.0 for edge src -> dst
    x:           (N, F_in) f32 node features
    conv1_w_t:   (F_in, H) f32 (pre-transposed nn.Linear weight), conv1_b: (H,)
    hidden_w_t:  (L-1, H, H) f32, hidden_b: (L-1, H)     (L = num_messagepasses)
    predict_w_t: (H, C) f32, predict_b: (C,)
    returns (1, C) f32 logits.
    """
    n, f_in = x.shape
    h_feats = conv1_w_t.shape[1]
    n_classes = predict_w_t.shape[1]
    num_hidden = int(hidden_w_t.shape[0])

    n_p = _round_up(n, _SUBLANE)
    f_p = _round_up(f_in, _LANE)
    h_p = _round_up(h_feats, _LANE)
    c_p = _round_up(n_classes, _LANE)

    # zero-pad (exact) and cast the big matmul operands to bf16 (A is 0/1 -> exact)
    adj_p = _pad2(adj, n_p, n_p).astype(jnp.bfloat16)
    x_p = _pad2(x, n_p, f_p).astype(jnp.bfloat16)
    w1_p = _pad2(conv1_w_t, f_p, h_p).astype(jnp.bfloat16)
    b1_p = jnp.pad(conv1_b, (0, h_p - h_feats)).reshape(1, h_p).astype(jnp.float32)

    if num_hidden > 0:
        wh_p = jnp.pad(hidden_w_t, ((0, 0), (0, h_p - h_feats),
                                    (0, h_p - h_feats))).astype(jnp.bfloat16)
        bh_p = jnp.pad(hidden_b, ((0, 0), (0, h_p - h_feats))
                       ).reshape(num_hidden, 1, h_p).astype(jnp.float32)
    else:  # dummy (never indexed) so the kernel signature stays fixed
        wh_p = jnp.zeros((1, h_p, h_p), jnp.bfloat16)
        bh_p = jnp.zeros((1, 1, h_p), jnp.float32)

    wp_p = _pad2(predict_w_t, h_p, c_p).astype(jnp.float32)
    bp_p = jnp.pad(predict_b, (0, c_p - n_classes)).reshape(1, c_p).astype(jnp.float32)

    # mean-readout weights: 1/N for real nodes, 0 for padded rows.
    # (Padded rows of H hold relu(bias) != 0, so they MUST be masked here.)
    mean_w = jnp.concatenate(
        [jnp.full((1, n), 1.0 / n, jnp.float32),
         jnp.zeros((1, n_p - n), jnp.float32)], axis=1)

    inputs = (adj_p, x_p, w1_p, b1_p, wh_p, bh_p, wp_p, bp_p, mean_w)

    def full_spec(a):
        nd = a.ndim
        return pl.BlockSpec(a.shape, lambda *_: (0,) * nd)

    flops = (2 * n_p * n_p * f_p + 2 * n_p * f_p * h_p
             + num_hidden * (2 * n_p * n_p * h_p + 2 * n_p * h_p * h_p)
             + 2 * n_p * h_p + 2 * h_p * c_p)
    bytes_accessed = sum(int(a.size) * a.dtype.itemsize for a in inputs) + c_p * 4

    out_p = pl.pallas_call(
        _make_fused_gcn_kernel(num_hidden),
        out_shape=jax.ShapeDtypeStruct((1, c_p), jnp.float32),
        in_specs=[full_spec(a) for a in inputs],
        out_specs=pl.BlockSpec((1, c_p), lambda *_: (0, 0)),
        cost_estimate=pl.CostEstimate(flops=flops, transcendentals=0,
                                      bytes_accessed=bytes_accessed),
    )(*inputs)

    return out_p[:, :n_classes]


# ---------------------------------- Driver -----------------------------------

if __name__ == "__main__":
    N = 16                  # nodes in the (single) graph
    IN_FEATS = 8
    H_FEATS = 32
    NUM_CLASSES = 4
    NUM_MESSAGEPASSES = 2   # conv1 + 1 hidden layer

    key = jax.random.PRNGKey(0)
    k_adj, k_x, k_w1, k_b1, k_w2, k_b2, k_wp, k_bp = jax.random.split(key, 8)

    # dense in-adjacency A[dst, src] in {0, 1}
    adj = (jax.random.uniform(k_adj, (N, N)) < 0.3).astype(jnp.float32)
    x = jax.random.normal(k_x, (N, IN_FEATS), dtype=jnp.float32)

    # nn.Linear-style init, stored pre-transposed as (in, out)
    def linear_params(kw, kb, fin, fout):
        scale = 1.0 / jnp.sqrt(jnp.float32(fin))
        w = jax.random.uniform(kw, (fout, fin), minval=-scale, maxval=scale,
                               dtype=jnp.float32)
        b = jax.random.uniform(kb, (fout,), minval=-scale, maxval=scale,
                               dtype=jnp.float32)
        return w.T, b

    conv1_w_t, conv1_b = linear_params(k_w1, k_b1, IN_FEATS, H_FEATS)
    w2_t, b2 = linear_params(k_w2, k_b2, H_FEATS, H_FEATS)
    hidden_w_t = w2_t[None]          # (NUM_MESSAGEPASSES - 1, H, H)
    hidden_b = b2[None]              # (NUM_MESSAGEPASSES - 1, H)
    predict_w_t, predict_b = linear_params(k_wp, k_bp, H_FEATS, NUM_CLASSES)

    logits = custom_gcn_forward(adj, x, conv1_w_t, conv1_b,
                                hidden_w_t, hidden_b, predict_w_t, predict_b)
    jax.block_until_ready(logits)
    assert logits.shape == (1, NUM_CLASSES)

    # Reference 1: same mixed bf16/f32 math in plain JAX (tight tolerance).
    a_b = adj.astype(jnp.bfloat16)

    def conv_ref(h_b, w, b):
        agg = jnp.dot(a_b, h_b, preferred_element_type=jnp.float32)
        z = jnp.dot(agg.astype(jnp.bfloat16), w.astype(jnp.bfloat16),
                    preferred_element_type=jnp.float32) + b
        return jnp.maximum(z, 0.0)

    h_ref = conv_ref(x.astype(jnp.bfloat16), conv1_w_t, conv1_b)
    for i in range(NUM_MESSAGEPASSES - 1):
        h_ref = conv_ref(h_ref.astype(jnp.bfloat16), hidden_w_t[i], hidden_b[i])
    ref_bf16 = jnp.mean(h_ref, axis=0, keepdims=True) @ predict_w_t + predict_b
    assert jnp.allclose(logits, ref_bf16, atol=2e-3, rtol=2e-3)

    # Reference 2: full f32 ground truth (looser tolerance due to bf16 operands).
    h32 = jnp.maximum(adj @ x @ conv1_w_t + conv1_b, 0.0)
    for i in range(NUM_MESSAGEPASSES - 1):
        h32 = jnp.maximum(adj @ h32 @ hidden_w_t[i] + hidden_b[i], 0.0)
    ref_f32 = jnp.mean(h32, axis=0, keepdims=True) @ predict_w_t + predict_b
    assert jnp.allclose(logits, ref_f32, atol=5e-2, rtol=5e-2)

    print("KERNEL_OK")
</pallas_src>

<mosaic_0001>
module attributes {stable_mosaic.version = 11 : i64} {
  func.func @kernel(%arg0: memref<16x16xbf16, #tpu.memory_space<vmem>>, %arg1: memref<16x128xbf16, #tpu.memory_space<vmem>>, %arg2: memref<128x128xbf16, #tpu.memory_space<vmem>>, %arg3: memref<1x128xf32, #tpu.memory_space<vmem>>, %arg4: memref<1x128x128xbf16, #tpu.memory_space<vmem>>, %arg5: memref<1x1x128xf32, #tpu.memory_space<vmem>>, %arg6: memref<128x128xf32, #tpu.memory_space<vmem>>, %arg7: memref<1x128xf32, #tpu.memory_space<vmem>>, %arg8: memref<1x16xf32, #tpu.memory_space<vmem>>, %arg9: memref<1x128xf32, #tpu.memory_space<vmem>>) attributes {dimension_semantics = [], scalar_prefetch = 0 : i64, scratch_operands = 0 : i64, tpu.core_type = #tpu.core_type<tc>} {
    %c0 = arith.constant 0 : index
    %c0_0 = arith.constant 0 : index
    %0 = vector.load %arg0[%c0, %c0_0] : memref<16x16xbf16, #tpu.memory_space<vmem>>, vector<16x16xbf16>
    %c0_1 = arith.constant 0 : index
    %c0_2 = arith.constant 0 : index
    %1 = vector.load %arg1[%c0_1, %c0_2] : memref<16x128xbf16, #tpu.memory_space<vmem>>, vector<16x128xbf16>
    %c0_3 = arith.constant 0 : index
    %c0_4 = arith.constant 0 : index
    %2 = vector.load %arg2[%c0_3, %c0_4] : memref<128x128xbf16, #tpu.memory_space<vmem>>, vector<128x128xbf16>
    %c0_5 = arith.constant 0 : index
    %c0_6 = arith.constant 0 : index
    %3 = vector.load %arg3[%c0_5, %c0_6] : memref<1x128xf32, #tpu.memory_space<vmem>>, vector<1x128xf32>
    %cst = arith.constant dense<0.000000e+00> : vector<16x128xf32>
    %4 = tpu.matmul %0, %1, %cst {dimension_numbers = #tpu.dot_dimension_numbers<[1], [0], [0], [1], [0, 0, 1, 1], [], []>} : vector<16x16xbf16>, vector<16x128xbf16>, vector<16x128xf32> -> vector<16x128xf32>
    %5 = arith.truncf %4 : vector<16x128xf32> to vector<16x128xbf16>
    %cst_7 = arith.constant dense<0.000000e+00> : vector<16x128xf32>
    %6 = tpu.matmul %5, %2, %cst_7 {dimension_numbers = #tpu.dot_dimension_numbers<[1], [0], [0], [1], [0, 0, 1, 1], [], []>} : vector<16x128xbf16>, vector<128x128xbf16>, vector<16x128xf32> -> vector<16x128xf32>
    %7 = vector.broadcast %3 : vector<1x128xf32> to vector<16x128xf32>
    %8 = arith.addf %6, %7 : vector<16x128xf32>
    %cst_8 = arith.constant 0.000000e+00 : f32
    %9 = vector.broadcast %cst_8 : f32 to vector<16x128xf32>
    %10 = arith.maximumf %8, %9 : vector<16x128xf32>
    %11 = arith.truncf %10 : vector<16x128xf32> to vector<16x128xbf16>
    %c0_9 = arith.constant 0 : index
    %c0_10 = arith.constant 0 : index
    %c0_11 = arith.constant 0 : index
    %12 = vector.load %arg4[%c0_9, %c0_10, %c0_11] : memref<1x128x128xbf16, #tpu.memory_space<vmem>>, vector<1x128x128xbf16>
    %13 = vector.shape_cast %12 : vector<1x128x128xbf16> to vector<128x128xbf16>
    %c0_12 = arith.constant 0 : index
    %c0_13 = arith.constant 0 : index
    %c0_14 = arith.constant 0 : index
    %14 = vector.load %arg5[%c0_12, %c0_13, %c0_14] : memref<1x1x128xf32, #tpu.memory_space<vmem>>, vector<1x1x128xf32>
    %15 = vector.shape_cast %14 : vector<1x1x128xf32> to vector<1x128xf32>
    %cst_15 = arith.constant dense<0.000000e+00> : vector<16x128xf32>
    %16 = tpu.matmul %0, %11, %cst_15 {dimension_numbers = #tpu.dot_dimension_numbers<[1], [0], [0], [1], [0, 0, 1, 1], [], []>} : vector<16x16xbf16>, vector<16x128xbf16>, vector<16x128xf32> -> vector<16x128xf32>
    %17 = arith.truncf %16 : vector<16x128xf32> to vector<16x128xbf16>
    %cst_16 = arith.constant dense<0.000000e+00> : vector<16x128xf32>
    %18 = tpu.matmul %17, %13, %cst_16 {dimension_numbers = #tpu.dot_dimension_numbers<[1], [0], [0], [1], [0, 0, 1, 1], [], []>} : vector<16x128xbf16>, vector<128x128xbf16>, vector<16x128xf32> -> vector<16x128xf32>
    %19 = vector.broadcast %15 : vector<1x128xf32> to vector<16x128xf32>
    %20 = arith.addf %18, %19 : vector<16x128xf32>
    %cst_17 = arith.constant 0.000000e+00 : f32
    %21 = vector.broadcast %cst_17 : f32 to vector<16x128xf32>
    %22 = arith.maximumf %20, %21 : vector<16x128xf32>
    %c0_18 = arith.constant 0 : index
    %c0_19 = arith.constant 0 : index
    %23 = vector.load %arg8[%c0_18, %c0_19] : memref<1x16xf32, #tpu.memory_space<vmem>>, vector<1x16xf32>
    %cst_20 = arith.constant dense<0.000000e+00> : vector<1x128xf32>
    %24 = tpu.matmul %23, %22, %cst_20 {dimension_numbers = #tpu.dot_dimension_numbers<[1], [0], [0], [1], [0, 0, 1, 1], [], []>} : vector<1x16xf32>, vector<16x128xf32>, vector<1x128xf32> -> vector<1x128xf32>
    %c0_21 = arith.constant 0 : index
    %c0_22 = arith.constant 0 : index
    %25 = vector.load %arg6[%c0_21, %c0_22] : memref<128x128xf32, #tpu.memory_space<vmem>>, vector<128x128xf32>
    %cst_23 = arith.constant dense<0.000000e+00> : vector<1x128xf32>
    %26 = tpu.matmul %24, %25, %cst_23 {dimension_numbers = #tpu.dot_dimension_numbers<[1], [0], [0], [1], [0, 0, 1, 1], [], []>} : vector<1x128xf32>, vector<128x128xf32>, vector<1x128xf32> -> vector<1x128xf32>
    %c0_24 = arith.constant 0 : index
    %c0_25 = arith.constant 0 : index
    %27 = vector.load %arg7[%c0_24, %c0_25] : memref<1x128xf32, #tpu.memory_space<vmem>>, vector<1x128xf32>
    %28 = arith.addf %26, %27 : vector<1x128xf32>
    %c0_26 = arith.constant 0 : index
    %c0_27 = arith.constant 0 : index
    %29 = vector.load %arg9[%c0_26, %c0_27] : memref<1x128xf32, #tpu.memory_space<vmem>>, vector<1x128xf32>
    tpu.vector_store %arg9[%c0_26, %c0_27], %28 {strides = array<i32>} : memref<1x128xf32, #tpu.memory_space<vmem>>, vector<1x128xf32>,
    return
  }
}

</mosaic_0001>

<llo_original>
// kernel: tpu_custom_call.1
$region0: #{tpu_custom_call.1}
  #allocation0 [shape = 'u32[]', space=smem, size = 0x4, offset = 0x4, fixed_abs, tag = 'smem constant byte address 0x4 - core index']
  #allocation1 [shape = 'u32[72,128]{1,0:T(1,128)}', space=vmem, size = 0x9000, scoped, tag = 'internal scratch']
  %s0 = inlined_call_operand.hbm [shape: bf16[16,16], index: 0, kind: input, shape index: {}]
  %s1 = inlined_call_operand.hbm [shape: bf16[16,128], index: 1, kind: input, shape index: {}]
  %s2 = inlined_call_operand.hbm [shape: bf16[128,128], index: 2, kind: input, shape index: {}]
  %s3 = inlined_call_operand.vmem [shape: f32[1,128], index: 3, kind: input, shape index: {}]
  %s4 = inlined_call_operand.hbm [shape: bf16[1,128,128], index: 4, kind: input, shape index: {}]
  %s5 = inlined_call_operand.vmem [shape: f32[1,1,128], index: 5, kind: input, shape index: {}]
  %s6 = inlined_call_operand.hbm [shape: f32[128,128], index: 6, kind: input, shape index: {}]
  %s7 = inlined_call_operand.vmem [shape: f32[1,128], index: 7, kind: input, shape index: {}]
  %s8 = inlined_call_operand.vmem [shape: f32[1,16], index: 8, kind: input, shape index: {}]
  %s9 = inlined_call_operand.hbm [shape: f32[1,128], index: 9, kind: output, shape index: {}]
  %s10 = sld [smem:[#allocation0]]
  $region66: #{tpu_custom_call.1} parent=0
    _
  %s12 = ssub.s32 1, %s10
  %s13 = scalar_select 0, %s12, %s10
  $region1: #{tpu_custom_call.1} parent=0
    #allocation2 [shape = 'u8[4096]{0}', space=vmem, size = 0x1000, scoped, tag = 'input window, operand 0, single buffered']
    #allocation3 [shape = 's32[1]{0}', space=sflag, size = 0x4, scoped, tag = 'scoped memory for tpu_custom_call.1']
    #allocation4 [shape = 's32[1]{0}', space=sflag, size = 0x4, scoped, tag = 'scoped memory for tpu_custom_call.1']
    #allocation5 [shape = 'u8[4096]{0}', space=vmem, size = 0x1000, scoped, tag = 'input window, operand 1, single buffered']
    #allocation6 [shape = 's32[1]{0}', space=sflag, size = 0x4, scoped, tag = 'scoped memory for tpu_custom_call.1']
    #allocation7 [shape = 'u8[32768]{0}', space=vmem, size = 0x8000, scoped, tag = 'input window, operand 2, single buffered']
    #allocation8 [shape = 'u8[32768]{0}', space=vmem, size = 0x8000, scoped, tag = 'input window, operand 4, single buffered']
    #allocation9 [shape = 's32[1]{0}', space=sflag, size = 0x4, scoped, tag = 'scoped memory for tpu_custom_call.1']
    #allocation10 [shape = 'u8[65536]{0}', space=vmem, size = 0x10000, scoped, tag = 'input window, operand 6, single buffered']
    #allocation11 [shape = 'u8[512]{0}', space=vmem, size = 0x400, scoped, tag = 'output window, operand 0, single buffered']
    %14 = vsyncpa [#allocation3], 0
    %15 = vsyncpa [#allocation6], 0
    %16 = vsyncpa [#allocation9], 0
    %17 = vsyncpa [#allocation4], 0
    // Predicated region
    $region2: #{tpu_custom_call.1} parent=1 // pred_check
      _
    $region3: #{tpu_custom_call.1} parent=1 // pred_check_branch
      %19 = sbr.rel (0) target = $region5
    $region4: #{tpu_custom_call.1} parent=1 // pred_region
      %21 = vsyncadd [#allocation3], 0
      %s22 = sshll.u32 %s0, 4
      %s23 = int_to_ptr.hbm [resolvable:$true] %s22
      %s24 = sshll.u32 [#allocation2], 4
      %s25 = int_to_ptr.vmem [resolvable:$true] %s24
      %30 = dma.hbm_to_vmem [thread:$0]  %s23, 128, %s25, [#allocation3], 64, 64, 4
    $region5: #{tpu_custom_call.1} parent=1 // pred_fallthru
      _
    // Predicated region
    $region6: #{tpu_custom_call.1} parent=1 // pred_check
      _
    $region7: #{tpu_custom_call.1} parent=1 // pred_check_branch
      %32 = sbr.rel (0) target = $region9
    $region8: #{tpu_custom_call.1} parent=1 // pred_region
      %34 = vsyncadd [#allocation6], 0
      %s35 = sshll.u32 %s1, 4
      %s36 = int_to_ptr.hbm [resolvable:$true] %s35
      %s37 = sshll.u32 [#allocation5], 4
      %s38 = int_to_ptr.vmem [resolvable:$true] %s37
      %43 = dma.hbm_to_vmem [thread:$0]  %s36, 128, %s38, [#allocation6], 64, 64, 4
    $region9: #{tpu_custom_call.1} parent=1 // pred_fallthru
      _
    // Predicated region
    $region10: #{tpu_custom_call.1} parent=1 // pred_check
      _
    $region11: #{tpu_custom_call.1} parent=1 // pred_check_branch
      %45 = sbr.rel (0) target = $region13
    $region12: #{tpu_custom_call.1} parent=1 // pred_region
      %47 = vsyncadd [#allocation6], 0
      %s48 = sshll.u32 %s2, 4
      %s49 = int_to_ptr.hbm [resolvable:$true] %s48
      %s50 = sshll.u32 [#allocation7], 4
      %s51 = int_to_ptr.vmem [resolvable:$true] %s50
      %56 = dma.hbm_to_vmem [thread:$0]  %s49, 1024, %s51, [#allocation6], 64, 64, 4
    $region13: #{tpu_custom_call.1} parent=1 // pred_fallthru
      _
    // Predicated region
    $region14: #{tpu_custom_call.1} parent=1 // pred_check
      _
    $region15: #{tpu_custom_call.1} parent=1 // pred_check_branch
      %58 = sbr.rel (0) target = $region17
    $region16: #{tpu_custom_call.1} parent=1 // pred_region
      _
    $region17: #{tpu_custom_call.1} parent=1 // pred_fallthru
      _
    // Predicated region
    $region18: #{tpu_custom_call.1} parent=1 // pred_check
      _
    $region19: #{tpu_custom_call.1} parent=1 // pred_check_branch
      %60 = sbr.rel (0) target = $region21
    $region20: #{tpu_custom_call.1} parent=1 // pred_region
      %62 = vsyncadd [#allocation9], 0
      %s63 = sshll.u32 %s4, 4
      %s64 = int_to_ptr.hbm [resolvable:$true] %s63
      %s65 = sshll.u32 [#allocation8], 4
      %s66 = int_to_ptr.vmem [resolvable:$true] %s65
      %71 = dma.hbm_to_vmem [thread:$0]  %s64, 1024, %s66, [#allocation9], 64, 64, 4
    $region21: #{tpu_custom_call.1} parent=1 // pred_fallthru
      _
    // Predicated region
    $region22: #{tpu_custom_call.1} parent=1 // pred_check
      _
    $region23: #{tpu_custom_call.1} parent=1 // pred_check_branch
      %73 = sbr.rel (0) target = $region25
    $region24: #{tpu_custom_call.1} parent=1 // pred_region
      _
    $region25: #{tpu_custom_call.1} parent=1 // pred_fallthru
      _
    // Predicated region
    $region26: #{tpu_custom_call.1} parent=1 // pred_check
      _
    $region27: #{tpu_custom_call.1} parent=1 // pred_check_branch
      %75 = sbr.rel (0) target = $region29
    $region28: #{tpu_custom_call.1} parent=1 // pred_region
      %77 = vsyncadd [#allocation9], 0
      %s78 = sshll.u32 %s6, 4
      %s79 = int_to_ptr.hbm [resolvable:$true] %s78
      %s80 = sshll.u32 [#allocation10], 4
      %s81 = int_to_ptr.vmem [resolvable:$true] %s80
      %86 = dma.hbm_to_vmem [thread:$0]  %s79, 2048, %s81, [#allocation9], 128, 128, 8
    $region29: #{tpu_custom_call.1} parent=1 // pred_fallthru
      _
    // Predicated region
    $region30: #{tpu_custom_call.1} parent=1 // pred_check
      _
    $region31: #{tpu_custom_call.1} parent=1 // pred_check_branch
      %88 = sbr.rel (0) target = $region33
    $region32: #{tpu_custom_call.1} parent=1 // pred_region
      _
    $region33: #{tpu_custom_call.1} parent=1 // pred_fallthru
      _
    // Predicated region
    $region34: #{tpu_custom_call.1} parent=1 // pred_check
      _
    $region35: #{tpu_custom_call.1} parent=1 // pred_check_branch
      %90 = sbr.rel (0) target = $region37
    $region36: #{tpu_custom_call.1} parent=1 // pred_region
      _
    $region37: #{tpu_custom_call.1} parent=1 // pred_fallthru
      _
    // Predicated region
    $region38: #{tpu_custom_call.1} parent=1 // pred_check
      _
    $region39: #{tpu_custom_call.1} parent=1 // pred_check_branch
      %92 = sbr.rel (0) target = $region41
    $region40: #{tpu_custom_call.1} parent=1 // pred_region
      %94 = dma.done [#allocation3], 128
    $region41: #{tpu_custom_call.1} parent=1 // pred_fallthru
      _
    // Predicated region
    $region42: #{tpu_custom_call.1} parent=1 // pred_check
      _
    $region43: #{tpu_custom_call.1} parent=1 // pred_check_branch
      %96 = sbr.rel (0) target = $region45
    $region44: #{tpu_custom_call.1} parent=1 // pred_region
      %98 = dma.done [#allocation6], 128
    $region45: #{tpu_custom_call.1} parent=1 // pred_fallthru
      _
    // Predicated region
    $region46: #{tpu_custom_call.1} parent=1 // pred_check
      _
    $region47: #{tpu_custom_call.1} parent=1 // pred_check_branch
      %100 = sbr.rel (0) target = $region49
    $region48: #{tpu_custom_call.1} parent=1 // pred_region
      %102 = dma.done [#allocation6], 1024
    $region49: #{tpu_custom_call.1} parent=1 // pred_fallthru
      _
    // Predicated region
    $region50: #{tpu_custom_call.1} parent=1 // pred_check
      _
    $region51: #{tpu_custom_call.1} parent=1 // pred_check_branch
      %104 = sbr.rel (0) target = $region53
    $region52: #{tpu_custom_call.1} parent=1 // pred_region
      %106 = dma.done [#allocation9], 1024
    $region53: #{tpu_custom_call.1} parent=1 // pred_fallthru
      _
    // Predicated region
    $region54: #{tpu_custom_call.1} parent=1 // pred_check
      _
    $region55: #{tpu_custom_call.1} parent=1 // pred_check_branch
      %108 = sbr.rel (0) target = $region57
    $region56: #{tpu_custom_call.1} parent=1 // pred_region
      %110 = dma.done [#allocation9], 2048
    $region57: #{tpu_custom_call.1} parent=1 // pred_fallthru
      _
    %v112 = vld [vmem:[#allocation2] sm:$0xf]
    %v113 = vld [vmem:[#allocation2 + $0x4] sm:$0xf]
    %v114 = vld [vmem:[#allocation5] sm:$0xf]
    %v115 = vld [vmem:[#allocation5 + $0x4] sm:$0xf]
    %v116 = vld [vmem:[#allocation7] sm:$0xf]
    %v117 = vld [vmem:[#allocation7 + $0x4] sm:$0xf]
    %v118 = vld [vmem:[#allocation7 + $0x8] sm:$0xf]
    %v119 = vld [vmem:[#allocation7 + $0xc] sm:$0xf]
    %v120 = vld [vmem:[#allocation7 + $0x10] sm:$0xf]
    %v121 = vld [vmem:[#allocation7 + $0x14] sm:$0xf]
    %v122 = vld [vmem:[#allocation7 + $0x18] sm:$0xf]
    %v123 = vld [vmem:[#allocation7 + $0x1c] sm:$0xf]
    %v124 = vld [vmem:[#allocation7 + $0x20] sm:$0xf]
    %v125 = vld [vmem:[#allocation7 + $0x24] sm:$0xf]
    %v126 = vld [vmem:[#allocation7 + $0x28] sm:$0xf]
    %v127 = vld [vmem:[#allocation7 + $0x2c] sm:$0xf]
    %v128 = vld [vmem:[#allocation7 + $0x30] sm:$0xf]
    %v129 = vld [vmem:[#allocation7 + $0x34] sm:$0xf]
    %v130 = vld [vmem:[#allocation7 + $0x38] sm:$0xf]
    %v131 = vld [vmem:[#allocation7 + $0x3c] sm:$0xf]
    %v132 = vld [vmem:[%s3] sm:$0x1]
    %v135 = vunpack.c.l.b16 %v112
    %v136 = vunpack.c.l.b16 %v113
    %v137 = vpack.c.b16 %v136, %v135
    %v140 = vunpack.c.l.b16 %v114
    %v141 = vunpack.c.l.b16 %v115
    %v142 = vpack.c.b16 %v141, %v140
    %vm144 = vcmask 130048
    %v146 = vsel %vm144, %v137, 0
    %148 = vmatpush.bf16.msra.mxu0 0
    %149 = vmatpush.bf16.msra.mxu0 0
    %150 = vmatpush.bf16.msra.mxu0 0
    %151 = vmatpush.bf16.msra.mxu0 0
    %152 = vmatpush.bf16.msra.mxu0 0
    %153 = vmatpush.bf16.msra.mxu0 0
    %154 = vmatpush.bf16.msra.mxu0 0
    %155 = vmatpush.bf16.msra.mxu0 %v142
    %156 = vmatmul.bf16.gmra.mxu0 %v146
    %v157 = vpop.f32.mrf.mxu0
    %v158 = vadd.f32 0.0, %v157
    %v159 = vpop.f32.mrf.mxu0
    %v160 = vadd.f32 0.0, %v159
    %161 = vdwg.mxu0
    %v162 = vpack.c.bf16 %v160, %v158
    %v164 = vperm.slane %v132, 0
    %v182 = vunpack.c.l.b16 %v116
    %v183 = vunpack.c.l.b16 %v117
    %v184 = vunpack.c.l.b16 %v118
    %v185 = vunpack.c.l.b16 %v119
    %v186 = vunpack.c.l.b16 %v120
    %v187 = vunpack.c.l.b16 %v121
    %v188 = vunpack.c.l.b16 %v122
    %v189 = vunpack.c.l.b16 %v123
    %v190 = vunpack.c.l.b16 %v124
    %v191 = vunpack.c.l.b16 %v125
    %v192 = vunpack.c.l.b16 %v126
    %v193 = vunpack.c.l.b16 %v127
    %v194 = vunpack.c.l.b16 %v128
    %v195 = vunpack.c.l.b16 %v129
    %v196 = vunpack.c.l.b16 %v130
    %v197 = vunpack.c.l.b16 %v131
    %v198 = vpack.c.b16 %v183, %v182
    %v199 = vpack.c.b16 %v185, %v184
    %v200 = vpack.c.b16 %v187, %v186
    %v201 = vpack.c.b16 %v189, %v188
    %v202 = vpack.c.b16 %v191, %v190
    %v203 = vpack.c.b16 %v193, %v192
    %v204 = vpack.c.b16 %v195, %v194
    %v205 = vpack.c.b16 %v197, %v196
    %214 = vmatpush.bf16.msra.mxu0 %v205
    %215 = vmatpush.bf16.msra.mxu0 %v204
    %216 = vmatpush.bf16.msra.mxu0 %v203
    %217 = vmatpush.bf16.msra.mxu0 %v202
    %218 = vmatpush.bf16.msra.mxu0 %v201
    %219 = vmatpush.bf16.msra.mxu0 %v200
    %220 = vmatpush.bf16.msra.mxu0 %v199
    %221 = vmatpush.bf16.msra.mxu0 %v198
    %222 = vmatmul.bf16.gmra.mxu0 %v162
    %v223 = vpop.f32.mrf.mxu0
    %v224 = vadd.f32 %v164, %v223
    %v225 = vpop.f32.mrf.mxu0
    %v226 = vadd.f32 %v164, %v225
    %227 = vdwg.mxu0
    %v228 = vmax.f32 %v224, 0.0
    %v229 = vmax.f32 %v226, 0.0
    %v230 = vpack.c.bf16 %v229, %v228
    %v231 = vld [vmem:[#allocation8] sm:$0xf]
    %v232 = vld [vmem:[#allocation8 + $0x4] sm:$0xf]
    %v233 = vld [vmem:[#allocation8 + $0x8] sm:$0xf]
    %v234 = vld [vmem:[#allocation8 + $0xc] sm:$0xf]
    %v235 = vld [vmem:[#allocation8 + $0x10] sm:$0xf]
    %v236 = vld [vmem:[#allocation8 + $0x14] sm:$0xf]
    %v237 = vld [vmem:[#allocation8 + $0x18] sm:$0xf]
    %v238 = vld [vmem:[#allocation8 + $0x1c] sm:$0xf]
    %v239 = vld [vmem:[#allocation8 + $0x20] sm:$0xf]
    %v240 = vld [vmem:[#allocation8 + $0x24] sm:$0xf]
    %v241 = vld [vmem:[#allocation8 + $0x28] sm:$0xf]
    %v242 = vld [vmem:[#allocation8 + $0x2c] sm:$0xf]
    %v243 = vld [vmem:[#allocation8 + $0x30] sm:$0xf]
    %v244 = vld [vmem:[#allocation8 + $0x34] sm:$0xf]
    %v245 = vld [vmem:[#allocation8 + $0x38] sm:$0xf]
    %v246 = vld [vmem:[#allocation8 + $0x3c] sm:$0xf]
    %v247 = vld [vmem:[%s5] sm:$0x1]
    %248 = vmatpush.bf16.msra.mxu0 0
    %249 = vmatpush.bf16.msra.mxu0 0
    %250 = vmatpush.bf16.msra.mxu0 0
    %251 = vmatpush.bf16.msra.mxu0 0
    %252 = vmatpush.bf16.msra.mxu0 0
    %253 = vmatpush.bf16.msra.mxu0 0
    %254 = vmatpush.bf16.msra.mxu0 0
    %255 = vmatpush.bf16.msra.mxu0 %v230
    %256 = vmatmul.bf16.gmra.mxu0 %v146
    %v257 = vpop.f32.mrf.mxu0
    %v258 = vadd.f32 0.0, %v257
    %v259 = vpop.f32.mrf.mxu0
    %v260 = vadd.f32 0.0, %v259
    %261 = vdwg.mxu0
    %v262 = vpack.c.bf16 %v260, %v258
    %v264 = vperm.slane %v247, 0
    %v282 = vunpack.c.l.b16 %v231
    %v283 = vunpack.c.l.b16 %v232
    %v284 = vunpack.c.l.b16 %v233
    %v285 = vunpack.c.l.b16 %v234
    %v286 = vunpack.c.l.b16 %v235
    %v287 = vunpack.c.l.b16 %v236
    %v288 = vunpack.c.l.b16 %v237
    %v289 = vunpack.c.l.b16 %v238
    %v290 = vunpack.c.l.b16 %v239
    %v291 = vunpack.c.l.b16 %v240
    %v292 = vunpack.c.l.b16 %v241
    %v293 = vunpack.c.l.b16 %v242
    %v294 = vunpack.c.l.b16 %v243
    %v295 = vunpack.c.l.b16 %v244
    %v296 = vunpack.c.l.b16 %v245
    %v297 = vunpack.c.l.b16 %v246
    %v298 = vpack.c.b16 %v283, %v282
    %v299 = vpack.c.b16 %v285, %v284
    %v300 = vpack.c.b16 %v287, %v286
    %v301 = vpack.c.b16 %v289, %v288
    %v302 = vpack.c.b16 %v291, %v290
    %v303 = vpack.c.b16 %v293, %v292
    %v304 = vpack.c.b16 %v295, %v294
    %v305 = vpack.c.b16 %v297, %v296
    %314 = vmatpush.bf16.msra.mxu0 %v305
    %315 = vmatpush.bf16.msra.mxu0 %v304
    %316 = vmatpush.bf16.msra.mxu0 %v303
    %317 = vmatpush.bf16.msra.mxu0 %v302
    %318 = vmatpush.bf16.msra.mxu0 %v301
    %319 = vmatpush.bf16.msra.mxu0 %v300
    %320 = vmatpush.bf16.msra.mxu0 %v299
    %321 = vmatpush.bf16.msra.mxu0 %v298
    %322 = vmatmul.bf16.gmra.mxu0 %v262
    %v323 = vpop.f32.mrf.mxu0
    %v324 = vadd.f32 %v264, %v323
    %v325 = vpop.f32.mrf.mxu0
    %v326 = vadd.f32 %v264, %v325
    %327 = vdwg.mxu0
    %v328 = vmax.f32 %v324, 0.0
    %v329 = vmax.f32 %v326, 0.0
    %v330 = vld [vmem:[%s8] sm:$0x1]
    %v332 = vsel %vm144, %v330, 0
    %334 = vmatpush.msra.mxu0 0.0
    %335 = vmatpush.msra.mxu0 0.0
    %336 = vmatpush.msra.mxu0 0.0
    %337 = vmatpush.msra.mxu0 0.0
    %338 = vmatpush.msra.mxu0 0.0
    %339 = vmatpush.msra.mxu0 0.0
    %340 = vmatpush.msra.mxu0 0.0
    %341 = vmatpush.msra.mxu0 0.0
    %342 = vmatpush.msra.mxu0 0.0
    %343 = vmatpush.msra.mxu0 0.0
    %344 = vmatpush.msra.mxu0 0.0
    %345 = vmatpush.msra.mxu0 0.0
    %346 = vmatpush.msra.mxu0 0.0
    %347 = vmatpush.msra.mxu0 0.0
    %348 = vmatpush.msra.mxu0 %v329
    %349 = vmatpush.msra.mxu0 %v328
    %350 = vmatmul.f32.gmra.mxu0 %v332
    %v351 = vpop.f32.mrf.mxu0
    %v352 = vadd.f32 0.0, %v351
    %353 = vdwg.mxu0
    %v354 = vld [vmem:[#allocation10] sm:$0xff]
    %v355 = vld [vmem:[#allocation10 + $0x8] sm:$0xff]
    %v356 = vld [vmem:[#allocation10 + $0x10] sm:$0xff]
    %v357 = vld [vmem:[#allocation10 + $0x18] sm:$0xff]
    %v358 = vld [vmem:[#allocation10 + $0x20] sm:$0xff]
    %v359 = vld [vmem:[#allocation10 + $0x28] sm:$0xff]
    %v360 = vld [vmem:[#allocation10 + $0x30] sm:$0xff]
    %v361 = vld [vmem:[#allocation10 + $0x38] sm:$0xff]
    %v362 = vld [vmem:[#allocation10 + $0x40] sm:$0xff]
    %v363 = vld [vmem:[#allocation10 + $0x48] sm:$0xff]
    %v364 = vld [vmem:[#allocation10 + $0x50] sm:$0xff]
    %v365 = vld [vmem:[#allocation10 + $0x58] sm:$0xff]
    %v366 = vld [vmem:[#allocation10 + $0x60] sm:$0xff]
    %v367 = vld [vmem:[#allocation10 + $0x68] sm:$0xff]
    %v368 = vld [vmem:[#allocation10 + $0x70] sm:$0xff]
    %v369 = vld [vmem:[#allocation10 + $0x78] sm:$0xff]
    %v370 = vld [vmem:[%s7] sm:$0x1]
    %371 = vmatpush.msra.mxu0 %v369
    %372 = vmatpush.msra.mxu0 %v368
    %373 = vmatpush.msra.mxu0 %v367
    %374 = vmatpush.msra.mxu0 %v366
    %375 = vmatpush.msra.mxu0 %v365
    %376 = vmatpush.msra.mxu0 %v364
    %377 = vmatpush.msra.mxu0 %v363
    %378 = vmatpush.msra.mxu0 %v362
    %379 = vmatpush.msra.mxu0 %v361
    %380 = vmatpush.msra.mxu0 %v360
    %381 = vmatpush.msra.mxu0 %v359
    %382 = vmatpush.msra.mxu0 %v358
    %383 = vmatpush.msra.mxu0 %v357
    %384 = vmatpush.msra.mxu0 %v356
    %385 = vmatpush.msra.mxu0 %v355
    %386 = vmatpush.msra.mxu0 %v354
    %387 = vmatmul.f32.gmra.mxu0 %v352
    %v388 = vpop.f32.mrf.mxu0
    %v389 = vadd.f32 %v370, %v388
    %390 = vdwg.mxu0
    %391 = vst [vmem:[#allocation11] sm:$0x1] %v389
    // Predicated region
    $region58: #{tpu_custom_call.1} parent=1 // pred_check
      _
    $region59: #{tpu_custom_call.1} parent=1 // pred_check_branch
      %393 = sbr.rel (0) target = $region61
    $region60: #{tpu_custom_call.1} parent=1 // pred_region
      %395 = vsyncadd [#allocation4], 0
      %s397 = sshll.u32 [#allocation11], 4
      %s398 = int_to_ptr.vmem [resolvable:$true] %s397
      %s399 = sshll.u32 %s9, 4
      %s400 = int_to_ptr.hbm [resolvable:$true] %s399
      %402 = dma.vmem_to_hbm [thread:$0]  %s398, 16, %s400, [#allocation4]
    $region61: #{tpu_custom_call.1} parent=1 // pred_fallthru
      _
    // Predicated region
    $region62: #{tpu_custom_call.1} parent=1 // pred_check
      _
    $region63: #{tpu_custom_call.1} parent=1 // pred_check_branch
      %404 = sbr.rel (0) target = $region65
    $region64: #{tpu_custom_call.1} parent=1 // pred_region
      %406 = dma.done [#allocation4], 16
    $region65: #{tpu_custom_call.1} parent=1 // pred_fallthru
      _
    %407 = vsyncpa [#allocation3], 1
    %408 = vsyncpa [#allocation6], 1
    %409 = vsyncpa [#allocation9], 1
    %410 = vsyncpa [#allocation4], 1

</llo_original>
